<compile_context>
chip_gen: v5e
topology: v5e:2x2
jax: 0.10.0
libtpu: 0.0.40
codegen_flags: <defaults>
</compile_context>

<pallas_src>
from functools import partial

import jax
import jax.numpy as jnp
from jax.experimental import pallas as pl
from jax.experimental.pallas import tpu as pltpu


# --------------------------------------------------------------------------- #
# Kernel
# --------------------------------------------------------------------------- #
def _conv_band_kernel(xp_ref, wband_ref, bias_ref, o_ref):
    """Conv2d(3x3, pad=1) as a single banded matmul.

    xp_ref:    (bt, H+2, (W+2)*Cin)      bf16  padded activations, bt images
    wband_ref: (KH*(W+2)*Cin, W*Cout)    bf16  banded weights (shared, resident)
    bias_ref:  (1, W*Cout)               f32   bias tiled across W
    o_ref:     (bt, H, W*Cout)           bf16  lane-dense output (W*Cout = 128)
    """
    bt, hh, wc = o_ref.shape
    kwc = xp_ref.shape[2]                 # (W+2)*Cin
    kh = wband_ref.shape[0] // kwc        # KH

    x = xp_ref[...]                                           # (bt, hh+kh-1, kwc)
    # Fold the KH row shifts into the contraction axis: one K = KH*Wp*Cin dot.
    lhs = jnp.concatenate([x[:, dy:dy + hh, :] for dy in range(kh)], axis=-1)
    lhs = lhs.reshape(bt * hh, kh * kwc)                      # (bt*hh, 216)

    acc = jnp.dot(lhs, wband_ref[...],
                  preferred_element_type=jnp.float32)         # (bt*hh, 128) f32
    acc = acc + bias_ref[...]                                 # (1, wc) broadcasts
    o_ref[...] = acc.reshape(bt, hh, wc).astype(o_ref.dtype)


# --------------------------------------------------------------------------- #
# Host-side helpers
# --------------------------------------------------------------------------- #
def _build_conv_band(weight, bias, W):
    """Banded weight (KH*Wp*Cin, W*Cout) + tiled bias row. Built once per
    (weight, W); im2col along the W/Cin axes is folded into this tiny shared
    operand instead of blowing up the activations.

    NOTE: the banded-in-lanes trick multiplies ~Wp/KW zero MACs on the MXU
    (≈6x at W=16) — negligible at these channel counts.
    TODO(synk): for large W (>~32) switch to a K=KH*KW*Cin im2col or a
    blocked-W band so the MXU isn't multiplying mostly zeros.
    """
    Cout, Cin, KH, KW = weight.shape
    pw = (KW - 1) // 2
    Wp = W + 2 * pw

    # band[dy, wp*Cin+ci, w*Cout+co] = weight[co, ci, dy, wp-w] (0 <= wp-w < KW)
    w_hwio = jnp.transpose(weight, (2, 3, 1, 0)).astype(jnp.float32)  # (KH,KW,Cin,Cout)
    sel = (jnp.arange(Wp)[None, :, None]
           == jnp.arange(W)[None, None, :] + jnp.arange(KW)[:, None, None]
           ).astype(jnp.float32)                                      # (KW, Wp, W)
    band = jnp.einsum('xpw,yxio->ypiwo', sel, w_hwio)                 # (KH,Wp,Cin,W,Cout)
    band = band.reshape(KH * Wp * Cin, W * Cout).astype(jnp.bfloat16)

    bias_row = jnp.tile(bias.astype(jnp.float32), W).reshape(1, W * Cout)
    return band, bias_row


def _pick_batch_block(B, H, target_rows=256):
    """Images per grid step and padded fused batch size.

    Target bt*H ~ target_rows output rows per matmul so the MXU M-stream
    amortizes push/drain and the ~0.35us per-grid-step overhead.  Pad B up to
    a multiple of bt (zero images) rather than shrinking the block for
    awkward batch sizes.  With multiple steps, round the step count to an
    even number so v7x's two TensorCores get balanced work.
    """
    bt = max(1, target_rows // H)
    if B <= bt:
        return B, B                       # single grid step, no padding
    steps = -(-B // bt)
    if steps % 2 == 1:
        steps += 1
    return bt, steps * bt


# --------------------------------------------------------------------------- #
# Fused forward
# --------------------------------------------------------------------------- #
@partial(jax.jit, static_argnames=("kh", "kw"))
def _module_parallel_conv_fwd(x_parallel, band, bias_row, *, kh, kw):
    """ModuleParallel(Conv2d).forward: shared module applied per list element,
    fused into a single pallas_call over the concatenated batch (NCHW in/out).
    """
    sizes = [x.shape[0] for x in x_parallel]
    x = jnp.concatenate(x_parallel, axis=0)
    B, Cin, H, W = x.shape
    Cout = bias_row.shape[1] // W
    ph, pw = (kh - 1) // 2, (kw - 1) // 2
    Hp, Wp = H + 2 * ph, W + 2 * pw

    # ---- layout glue (candidate for input fusion into the pallas_call) ----
    xh = jnp.transpose(x, (0, 2, 3, 1))                        # (B, H, W, Cin)
    xp = jnp.pad(xh, ((0, 0), (ph, ph), (pw, pw), (0, 0)))     # (B, Hp, Wp, Cin)
    xp = xp.reshape(B, Hp, Wp * Cin).astype(jnp.bfloat16)

    bt, B_pad = _pick_batch_block(B, H)
    if B_pad != B:
        xp = jnp.pad(xp, ((0, B_pad - B), (0, 0), (0, 0)))
    grid = (B_pad // bt,)

    # True conv FLOPs (the banded MXU formulation does ~Wp/kw more MACs).
    cost = pl.CostEstimate(
        flops=2 * B_pad * H * W * Cout * Cin * kh * kw,
        transcendentals=0,
        bytes_accessed=(xp.size * 2 + band.size * 2
                        + bias_row.size * 4 + B_pad * H * W * Cout * 2),
    )

    out = pl.pallas_call(
        _conv_band_kernel,
        out_shape=jax.ShapeDtypeStruct((B_pad, H, W * Cout), jnp.bfloat16),
        grid_spec=pltpu.PrefetchScalarGridSpec(
            num_scalar_prefetch=0,
            grid=grid,
            in_specs=[
                pl.BlockSpec((bt, Hp, Wp * Cin), lambda i: (i, 0, 0)),
                pl.BlockSpec((kh * Wp * Cin, W * Cout), lambda i: (0, 0)),
                pl.BlockSpec((1, W * Cout), lambda i: (0, 0)),
            ],
            out_specs=pl.BlockSpec((bt, H, W * Cout), lambda i: (i, 0, 0)),
        ),
        compiler_params=pltpu.CompilerParams(
            dimension_semantics=("parallel",),
            allow_input_fusion=[True, False, False],
        ),
        cost_estimate=cost,
    )(xp, band, bias_row)

    # bf16 slab -> NCHW in the caller's dtype (cast fuses with the transpose).
    out = out[:B].reshape(B, H, W, Cout)
    out = jnp.transpose(out, (0, 3, 1, 2)).astype(x.dtype)     # (B, Cout, H, W)

    outs, start = [], 0
    for n in sizes:
        outs.append(out[start:start + n])
        start += n
    return outs


class ModuleParallelConv2d:
    """ModuleParallel(nn.Conv2d(Cin, Cout, 3, padding=1, bias=True)).

    The shared (banded) weights and tiled bias are precomputed once per
    weight/width and reused across calls; the forward is a single jitted
    pallas_call over the concatenated list batch.
    """

    def __init__(self, weight, bias):
        self.weight = weight
        self.bias = bias
        self.kh = int(weight.shape[2])
        self.kw = int(weight.shape[3])
        assert self.kh % 2 == 1 and self.kw % 2 == 1, "odd kernel / same-pad only"
        self._band_cache = {}

    def _get_band(self, W):
        if W not in self._band_cache:
            band, bias_row = _build_conv_band(self.weight, self.bias, W)
            self._band_cache[W] = (jax.block_until_ready(band),
                                   jax.block_until_ready(bias_row))
        return self._band_cache[W]

    def __call__(self, x_parallel):
        W = int(x_parallel[0].shape[-1])
        band, bias_row = self._get_band(W)
        return _module_parallel_conv_fwd(list(x_parallel), band, bias_row,
                                         kh=self.kh, kw=self.kw)


# --------------------------------------------------------------------------- #
# Demo / self-check
# --------------------------------------------------------------------------- #
if __name__ == "__main__":
    key = jax.random.PRNGKey(0)
    k_w, k_b, k_x0, k_x1 = jax.random.split(key, 4)

    N, Cin, H, W = 2, 4, 16, 16
    Cout, KH, KW = 8, 3, 3

    # deterministic "kaiming-ish" init for the shared Conv2d module
    fan_in = Cin * KH * KW
    weight = jax.random.normal(k_w, (Cout, Cin, KH, KW), jnp.float32) * (2.0 / fan_in) ** 0.5
    bias = jax.random.normal(k_b, (Cout,), jnp.float32) * 0.01

    x_parallel = [
        jax.random.normal(k_x0, (N, Cin, H, W), jnp.float32),
        jax.random.normal(k_x1, (N, Cin, H, W), jnp.float32),
    ]

    module = ModuleParallelConv2d(weight, bias)
    outs = module(x_parallel)
    outs = [jax.block_until_ready(o) for o in outs]

    # reference: plain-JAX conv on each list element (shared weights)
    def ref_conv(x):
        r = jax.lax.conv_general_dilated(
            x, weight, window_strides=(1, 1), padding=((1, 1), (1, 1)),
            dimension_numbers=("NCHW", "OIHW", "NCHW"))
        return r + bias.reshape(1, Cout, 1, 1)

    refs = [ref_conv(x) for x in x_parallel]
    for o, r in zip(outs, refs):
        assert o.shape == (N, Cout, H, W)
        # bf16 MXU inputs / bf16 kernel output with f32 accumulation -> loose tol
        assert jnp.allclose(o, r, atol=5e-2, rtol=5e-2)

    print("KERNEL_OK")
</pallas_src>

<mosaic_0001>
module attributes {stable_mosaic.version = 11 : i64} {
  func.func @_conv_band_kernel(%arg0: i32, %arg1: memref<4x18x72xbf16, #tpu.memory_space<vmem>>, %arg2: memref<216x128xbf16, #tpu.memory_space<vmem>>, %arg3: memref<1x128xf32, #tpu.memory_space<vmem>>, %arg4: memref<4x16x128xbf16, #tpu.memory_space<vmem>>) attributes {dimension_semantics = [#tpu.dimension_semantics<parallel>], iteration_bounds = array<i64: 1>, scalar_prefetch = 0 : i64, scratch_operands = 0 : i64, tpu.core_type = #tpu.core_type<tc>, window_params = [{transform_indices = @transform_0, window_bounds = array<i64: 4, 18, 72>}, {pipeline_mode = #tpu.pipeline_mode<synchronous>, transform_indices = @transform_1, window_bounds = array<i64: 216, 128>}, {pipeline_mode = #tpu.pipeline_mode<synchronous>, transform_indices = @transform_2, window_bounds = array<i64: 1, 128>}, {transform_indices = @transform_3, window_bounds = array<i64: 4, 16, 128>}]} {
    %c0 = arith.constant 0 : index
    %c0_0 = arith.constant 0 : index
    %c0_1 = arith.constant 0 : index
    %0 = vector.load %arg1[%c0, %c0_0, %c0_1] : memref<4x18x72xbf16, #tpu.memory_space<vmem>>, vector<4x18x72xbf16>
    %1 = vector.extract_strided_slice %0 {offsets = [0, 0, 0], sizes = [4, 16, 72], strides = [1, 1, 1]} : vector<4x18x72xbf16> to vector<4x16x72xbf16>
    %2 = vector.extract_strided_slice %0 {offsets = [0, 1, 0], sizes = [4, 16, 72], strides = [1, 1, 1]} : vector<4x18x72xbf16> to vector<4x16x72xbf16>
    %3 = vector.extract_strided_slice %0 {offsets = [0, 2, 0], sizes = [4, 16, 72], strides = [1, 1, 1]} : vector<4x18x72xbf16> to vector<4x16x72xbf16>
    %4 = tpu.concatenate %1, %2, %3 in 2 : vector<4x16x72xbf16>, vector<4x16x72xbf16>, vector<4x16x72xbf16> -> vector<4x16x216xbf16>
    %5 = vector.shape_cast %4 : vector<4x16x216xbf16> to vector<64x216xbf16>
    %c0_2 = arith.constant 0 : index
    %c0_3 = arith.constant 0 : index
    %6 = vector.load %arg2[%c0_2, %c0_3] : memref<216x128xbf16, #tpu.memory_space<vmem>>, vector<216x128xbf16>
    %cst = arith.constant dense<0.000000e+00> : vector<64x128xf32>
    %7 = tpu.matmul %5, %6, %cst {dimension_numbers = #tpu.dot_dimension_numbers<[1], [0], [0], [1], [0, 0, 1, 1], [], []>} : vector<64x216xbf16>, vector<216x128xbf16>, vector<64x128xf32> -> vector<64x128xf32>
    %c0_4 = arith.constant 0 : index
    %c0_5 = arith.constant 0 : index
    %8 = vector.load %arg3[%c0_4, %c0_5] : memref<1x128xf32, #tpu.memory_space<vmem>>, vector<1x128xf32>
    %9 = vector.broadcast %8 : vector<1x128xf32> to vector<64x128xf32>
    %10 = arith.addf %7, %9 : vector<64x128xf32>
    %11 = vector.shape_cast %10 : vector<64x128xf32> to vector<4x16x128xf32>
    %12 = arith.truncf %11 : vector<4x16x128xf32> to vector<4x16x128xbf16>
    %c0_6 = arith.constant 0 : index
    %c0_7 = arith.constant 0 : index
    %c0_8 = arith.constant 0 : index
    %13 = vector.load %arg4[%c0_6, %c0_7, %c0_8] : memref<4x16x128xbf16, #tpu.memory_space<vmem>>, vector<4x16x128xbf16>
    tpu.vector_store %arg4[%c0_6, %c0_7, %c0_8], %12 {strides = array<i32>} : memref<4x16x128xbf16, #tpu.memory_space<vmem>>, vector<4x16x128xbf16>,
    return
  }
  func.func @transform_0(%arg0: i32) -> (i32, i32, i32) {
    %c0_i32 = arith.constant 0 : i32
    %c0_i32_0 = arith.constant 0 : i32
    %c0_i32_1 = arith.constant 0 : i32
    return %arg0, %c0_i32, %c0_i32_0 : i32, i32, i32
  }
  func.func @transform_1(%arg0: i32) -> (i32, i32) {
    %c0_i32 = arith.constant 0 : i32
    %c0_i32_0 = arith.constant 0 : i32
    %c0_i32_1 = arith.constant 0 : i32
    return %c0_i32, %c0_i32_0 : i32, i32
  }
  func.func @transform_2(%arg0: i32) -> (i32, i32) {
    %c0_i32 = arith.constant 0 : i32
    %c0_i32_0 = arith.constant 0 : i32
    %c0_i32_1 = arith.constant 0 : i32
    return %c0_i32, %c0_i32_0 : i32, i32
  }
  func.func @transform_3(%arg0: i32) -> (i32, i32, i32) {
    %c0_i32 = arith.constant 0 : i32
    %c0_i32_0 = arith.constant 0 : i32
    %c0_i32_1 = arith.constant 0 : i32
    return %arg0, %c0_i32, %c0_i32_0 : i32, i32, i32
  }
}

</mosaic_0001>

<llo_original>
// kernel: _module_parallel_conv_fwd.1
$region0: #{_module_parallel_conv_fwd.1}
  #allocation0 [shape = 'u32[]', space=smem, size = 0x4, offset = 0x4, fixed_abs, tag = 'smem constant byte address 0x4 - core index']
  #allocation1 [shape = 'u32[72,128]{1,0:T(1,128)}', space=vmem, size = 0x9000, scoped, tag = 'internal scratch']
  %s0 = inlined_call_operand.vmem [shape: bf16[4,18,72], index: 0, kind: input, shape index: {}]
  %s1 = inlined_call_operand.vmem [shape: bf16[216,128], index: 1, kind: input, shape index: {}]
  %s2 = inlined_call_operand.vmem [shape: f32[1,128], index: 2, kind: input, shape index: {}]
  %s3 = inlined_call_operand.vmem [shape: bf16[4,16,128], index: 3, kind: output, shape index: {}]
  %s4 = sld [smem:[#allocation0]]
  $region22: #{_module_parallel_conv_fwd.1} parent=0
    _
  %s6 = ssub.s32 1, %s4
  %s7 = scalar_select 0, %s6, %s4
  // Predicated region
  $region2: #{_module_parallel_conv_fwd.1} parent=0 // pred_check
    _
  $region3: #{_module_parallel_conv_fwd.1} parent=0 // pred_check_branch
    %9 = sbr.rel (0) target = $region5
  $region4: #{_module_parallel_conv_fwd.1} parent=0 // pred_region
    _
  $region5: #{_module_parallel_conv_fwd.1} parent=0 // pred_fallthru
    _
  // Predicated region
  $region6: #{_module_parallel_conv_fwd.1} parent=0 // pred_check
    _
  $region7: #{_module_parallel_conv_fwd.1} parent=0 // pred_check_branch
    %11 = sbr.rel (0) target = $region9
  $region8: #{_module_parallel_conv_fwd.1} parent=0 // pred_region
    _
  $region9: #{_module_parallel_conv_fwd.1} parent=0 // pred_fallthru
    _
  // Predicated region
  $region10: #{_module_parallel_conv_fwd.1} parent=0 // pred_check
    _
  $region11: #{_module_parallel_conv_fwd.1} parent=0 // pred_check_branch
    %13 = sbr.rel (0) target = $region13
  $region12: #{_module_parallel_conv_fwd.1} parent=0 // pred_region
    _
  $region13: #{_module_parallel_conv_fwd.1} parent=0 // pred_fallthru
    _
  %v15 = vld [vmem:[%s0] sm:$0xf]
  %v16 = vld [vmem:[%s0 + $0x4] sm:$0xf]
  %v17 = vld [vmem:[%s0 + $0x8] sm:$0x1]
  %v18 = vld [vmem:[%s0 + $0xc] sm:$0xf]
  %v19 = vld [vmem:[%s0 + $0x10] sm:$0xf]
  %v20 = vld [vmem:[%s0 + $0x14] sm:$0x1]
  %v21 = vld [vmem:[%s0 + $0x18] sm:$0xf]
  %v22 = vld [vmem:[%s0 + $0x1c] sm:$0xf]
  %v23 = vld [vmem:[%s0 + $0x20] sm:$0x1]
  %v24 = vld [vmem:[%s0 + $0x24] sm:$0xf]
  %v25 = vld [vmem:[%s0 + $0x28] sm:$0xf]
  %v26 = vld [vmem:[%s0 + $0x2c] sm:$0x1]
  %v35 = vunpack.c.l.b16 %v15
  %v36 = vunpack.c.l.b16 %v16
  %v37 = vunpack.c.l.b16 %v18
  %v38 = vunpack.c.l.b16 %v19
  %v39 = vunpack.c.l.b16 %v21
  %v40 = vunpack.c.l.b16 %v22
  %v41 = vunpack.c.l.b16 %v24
  %v42 = vunpack.c.l.b16 %v25
  %v43 = vpack.c.b16 %v36, %v35
  %v44 = vpack.c.b16 %v38, %v37
  %v45 = vpack.c.b16 %v40, %v39
  %v46 = vpack.c.b16 %v42, %v41
  %v51 = vunpack.c.l.b16 %v17
  %v52 = vunpack.c.l.b16 %v20
  %v53 = vunpack.c.l.b16 %v23
  %v54 = vunpack.c.l.b16 %v26
  %v55 = vpack.c.b16 %v51, %v51
  %v56 = vpack.c.b16 %v52, %v52
  %v57 = vpack.c.b16 %v53, %v53
  %v58 = vpack.c.b16 %v54, %v54
  %vm59 = vsmask.f32 7424
  %v61 = vshrl.u32 %v43, 16
  %v63 = vshll.u32 %v43, 16
  %v65 = vrot.slane %v63, 1
  %v66 = vor.u32 %v61, %v65
  %v68 = vshll.u32 %v55, 16
  %v70 = vrot.slane %v68, 1
  %v71 = vsel %vm59, %v66, %v70
  %v73 = vshrl.u32 %v44, 16
  %v75 = vshll.u32 %v44, 16
  %v77 = vrot.slane %v75, 1
  %v78 = vor.u32 %v73, %v77
  %v80 = vshll.u32 %v56, 16
  %v82 = vrot.slane %v80, 1
  %v83 = vsel %vm59, %v78, %v82
  %v85 = vshrl.u32 %v45, 16
  %v87 = vshll.u32 %v45, 16
  %v89 = vrot.slane %v87, 1
  %v90 = vor.u32 %v85, %v89
  %v92 = vshll.u32 %v57, 16
  %v94 = vrot.slane %v92, 1
  %v95 = vsel %vm59, %v90, %v94
  %v97 = vshrl.u32 %v46, 16
  %v99 = vshll.u32 %v46, 16
  %v101 = vrot.slane %v99, 1
  %v102 = vor.u32 %v97, %v101
  %v104 = vshll.u32 %v58, 16
  %v106 = vrot.slane %v104, 1
  %v107 = vsel %vm59, %v102, %v106
  %108 = vrot.lane.b32.xlu0 %v71, 72
  %v109 = vpop.permute.xlu0 %108
  %110 = vrot.lane.b32.xlu0 %v83, 72
  %v111 = vpop.permute.xlu0 %110
  %112 = vrot.lane.b32.xlu0 %v95, 72
  %v113 = vpop.permute.xlu0 %112
  %114 = vrot.lane.b32.xlu0 %v107, 72
  %v115 = vpop.permute.xlu0 %114
  %vm116 = vcmask 1046528
  %v117 = vrot.slane %v43, 1
  %v118 = vrot.slane %v55, 1
  %v119 = vsel %vm116, %v117, %v118
  %v120 = vrot.slane %v44, 1
  %v121 = vrot.slane %v56, 1
  %v122 = vsel %vm116, %v120, %v121
  %v123 = vrot.slane %v45, 1
  %v124 = vrot.slane %v57, 1
  %v125 = vsel %vm116, %v123, %v124
  %v126 = vrot.slane %v46, 1
  %v127 = vrot.slane %v58, 1
  %v128 = vsel %vm116, %v126, %v127
  %129 = vrot.lane.b32.xlu0 %v119, 16
  %v130 = vpop.permute.xlu0 %129
  %131 = vrot.lane.b32.xlu0 %v122, 16
  %v132 = vpop.permute.xlu0 %131
  %133 = vrot.lane.b32.xlu0 %v125, 16
  %v134 = vpop.permute.xlu0 %133
  %135 = vrot.lane.b32.xlu0 %v128, 16
  %v136 = vpop.permute.xlu0 %135
  %vm137 = vcmask 588800
  %v139 = vsel %vm137, %v43, %v109
  %v142 = vsel %vm137, %v44, %v111
  %v145 = vsel %vm137, %v45, %v113
  %v148 = vsel %vm137, %v46, %v115
  %vm150 = vcmask 130048
  %v152 = vsel %vm150, %v109, %v130
  %v154 = vsel %vm150, %v111, %v132
  %v156 = vsel %vm150, %v113, %v134
  %v158 = vsel %vm150, %v115, %v136
  %v159 = vld [vmem:[%s1] sm:$0xf]
  %v160 = vld [vmem:[%s1 + $0x4] sm:$0xf]
  %v161 = vld [vmem:[%s1 + $0x8] sm:$0xf]
  %v162 = vld [vmem:[%s1 + $0xc] sm:$0xf]
  %v163 = vld [vmem:[%s1 + $0x10] sm:$0xf]
  %v164 = vld [vmem:[%s1 + $0x14] sm:$0xf]
  %v165 = vld [vmem:[%s1 + $0x18] sm:$0xf]
  %v166 = vld [vmem:[%s1 + $0x1c] sm:$0xf]
  %v167 = vld [vmem:[%s1 + $0x20] sm:$0xf]
  %v168 = vld [vmem:[%s1 + $0x24] sm:$0xf]
  %v169 = vld [vmem:[%s1 + $0x28] sm:$0xf]
  %v170 = vld [vmem:[%s1 + $0x2c] sm:$0xf]
  %v171 = vld [vmem:[%s1 + $0x30] sm:$0xf]
  %v172 = vld [vmem:[%s1 + $0x34] sm:$0xf]
  %v173 = vld [vmem:[%s1 + $0x38] sm:$0xf]
  %v174 = vld [vmem:[%s1 + $0x3c] sm:$0xf]
  %v175 = vld [vmem:[%s1 + $0x40] sm:$0xf]
  %v176 = vld [vmem:[%s1 + $0x44] sm:$0xf]
  %v177 = vld [vmem:[%s1 + $0x48] sm:$0xf]
  %v178 = vld [vmem:[%s1 + $0x4c] sm:$0xf]
  %v179 = vld [vmem:[%s1 + $0x50] sm:$0xf]
  %v180 = vld [vmem:[%s1 + $0x54] sm:$0xf]
  %v181 = vld [vmem:[%s1 + $0x58] sm:$0xf]
  %v182 = vld [vmem:[%s1 + $0x5c] sm:$0xf]
  %v183 = vld [vmem:[%s1 + $0x60] sm:$0xf]
  %v184 = vld [vmem:[%s1 + $0x64] sm:$0xf]
  %v185 = vld [vmem:[%s1 + $0x68] sm:$0xf]
  %v186 = vld [vmem:[%s2] sm:$0x1]
  %v188 = vperm.slane %v186, 0
  %v217 = vunpack.c.l.b16 %v159
  %v218 = vunpack.c.l.b16 %v160
  %v219 = vunpack.c.l.b16 %v161
  %v220 = vunpack.c.l.b16 %v162
  %v221 = vunpack.c.l.b16 %v163
  %v222 = vunpack.c.l.b16 %v164
  %v223 = vunpack.c.l.b16 %v165
  %v224 = vunpack.c.l.b16 %v166
  %v225 = vunpack.c.l.b16 %v167
  %v226 = vunpack.c.l.b16 %v168
  %v227 = vunpack.c.l.b16 %v169
  %v228 = vunpack.c.l.b16 %v170
  %v229 = vunpack.c.l.b16 %v171
  %v230 = vunpack.c.l.b16 %v172
  %v231 = vunpack.c.l.b16 %v173
  %v232 = vunpack.c.l.b16 %v174
  %v233 = vunpack.c.l.b16 %v175
  %v234 = vunpack.c.l.b16 %v176
  %v235 = vunpack.c.l.b16 %v177
  %v236 = vunpack.c.l.b16 %v178
  %v237 = vunpack.c.l.b16 %v179
  %v238 = vunpack.c.l.b16 %v180
  %v239 = vunpack.c.l.b16 %v181
  %v240 = vunpack.c.l.b16 %v182
  %v241 = vunpack.c.l.b16 %v183
  %v242 = vunpack.c.l.b16 %v184
  %v243 = vunpack.c.l.b16 %v185
  %v244 = vpack.c.b16 %v218, %v217
  %v245 = vpack.c.b16 %v220, %v219
  %v246 = vpack.c.b16 %v222, %v221
  %v247 = vpack.c.b16 %v224, %v223
  %v248 = vpack.c.b16 %v226, %v225
  %v249 = vpack.c.b16 %v228, %v227
  %v250 = vpack.c.b16 %v230, %v229
  %v251 = vpack.c.b16 %v232, %v231
  %v252 = vpack.c.b16 %v234, %v233
  %v253 = vpack.c.b16 %v236, %v235
  %v254 = vpack.c.b16 %v238, %v237
  %v255 = vpack.c.b16 %v240, %v239
  %v256 = vpack.c.b16 %v242, %v241
  %v257 = vpack.c.b16 %v243, %v243
  %vm271 = vcmask 719872
  %v272 = vsel %vm271, %v152, 0
  %v274 = vsel %vm271, %v154, 0
  %v276 = vsel %vm271, %v156, 0
  %v278 = vsel %vm271, %v158, 0
  %vm280 = vcmask 1043456
  %v282 = vsel %vm280, %v257, 0
  %284 = vmatpush.bf16.msra.mxu0 %v251
  %285 = vmatpush.bf16.msra.mxu0 %v250
  %286 = vmatpush.bf16.msra.mxu0 %v249
  %287 = vmatpush.bf16.msra.mxu0 %v248
  %288 = vmatpush.bf16.msra.mxu0 %v247
  %289 = vmatpush.bf16.msra.mxu0 %v246
  %290 = vmatpush.bf16.msra.mxu0 %v245
  %291 = vmatpush.bf16.msra.mxu0 %v244
  %292 = vmatmul.bf16.gmra.mxu0 %v139
  %v293 = vpop.f32.mrf.mxu0
  %v294 = vadd.f32 %v188, %v293
  %v295 = vpop.f32.mrf.mxu0
  %v296 = vadd.f32 %v188, %v295
  %297 = vmatmul.bf16.gmra.mxu0 %v142
  %v298 = vpop.f32.mrf.mxu0
  %v299 = vadd.f32 %v188, %v298
  %v300 = vpop.f32.mrf.mxu0
  %v301 = vadd.f32 %v188, %v300
  %302 = vmatmul.bf16.gmra.mxu0 %v145
  %v303 = vpop.f32.mrf.mxu0
  %v304 = vadd.f32 %v188, %v303
  %v305 = vpop.f32.mrf.mxu0
  %v306 = vadd.f32 %v188, %v305
  %307 = vmatmul.bf16.gmra.mxu0 %v148
  %v308 = vpop.f32.mrf.mxu0
  %v309 = vadd.f32 %v188, %v308
  %v310 = vpop.f32.mrf.mxu0
  %v311 = vadd.f32 %v188, %v310
  %312 = vdwg.mxu0
  %313 = vmatpush.bf16.msra.mxu0 0
  %314 = vmatpush.bf16.msra.mxu0 0
  %315 = vmatpush.bf16.msra.mxu0 %v282
  %316 = vmatpush.bf16.msra.mxu0 %v256
  %317 = vmatpush.bf16.msra.mxu0 %v255
  %318 = vmatpush.bf16.msra.mxu0 %v254
  %319 = vmatpush.bf16.msra.mxu0 %v253
  %320 = vmatpush.bf16.msra.mxu0 %v252
  %321 = vmatmul.bf16.gmra.mxu0 %v272
  %v322 = vpop.f32.mrf.mxu0
  %v323 = vadd.f32 %v294, %v322
  %v324 = vpop.f32.mrf.mxu0
  %v325 = vadd.f32 %v296, %v324
  %326 = vmatmul.bf16.gmra.mxu0 %v274
  %v327 = vpop.f32.mrf.mxu0
  %v328 = vadd.f32 %v299, %v327
  %v329 = vpop.f32.mrf.mxu0
  %v330 = vadd.f32 %v301, %v329
  %331 = vmatmul.bf16.gmra.mxu0 %v276
  %v332 = vpop.f32.mrf.mxu0
  %v333 = vadd.f32 %v304, %v332
  %v334 = vpop.f32.mrf.mxu0
  %v335 = vadd.f32 %v306, %v334
  %336 = vmatmul.bf16.gmra.mxu0 %v278
  %v337 = vpop.f32.mrf.mxu0
  %v338 = vadd.f32 %v309, %v337
  %v339 = vpop.f32.mrf.mxu0
  %v340 = vadd.f32 %v311, %v339
  %341 = vdwg.mxu0
  %v342 = vpack.c.bf16 %v323, %v323
  %v343 = vpack.c.bf16 %v325, %v325
  %v344 = vpack.c.bf16 %v328, %v328
  %v345 = vpack.c.bf16 %v330, %v330
  %v346 = vpack.c.bf16 %v333, %v333
  %v347 = vpack.c.bf16 %v335, %v335
  %v348 = vpack.c.bf16 %v338, %v338
  %v349 = vpack.c.bf16 %v340, %v340
  %350 = vst [vmem:[%s3] sm:$0xf] %v342
  %351 = vst [vmem:[%s3 + $0x4] sm:$0xf] %v343
  %352 = vst [vmem:[%s3 + $0x8] sm:$0xf] %v344
  %353 = vst [vmem:[%s3 + $0xc] sm:$0xf] %v345
  %354 = vst [vmem:[%s3 + $0x10] sm:$0xf] %v346
  %355 = vst [vmem:[%s3 + $0x14] sm:$0xf] %v347
  %356 = vst [vmem:[%s3 + $0x18] sm:$0xf] %v348
  %357 = vst [vmem:[%s3 + $0x1c] sm:$0xf] %v349
  // Predicated region
  $region14: #{_module_parallel_conv_fwd.1} parent=0 // pred_check
    _
  $region15: #{_module_parallel_conv_fwd.1} parent=0 // pred_check_branch
    %359 = sbr.rel (0) target = $region17
  $region16: #{_module_parallel_conv_fwd.1} parent=0 // pred_region
    _
  $region17: #{_module_parallel_conv_fwd.1} parent=0 // pred_fallthru
    _
  // Predicated region
  $region18: #{_module_parallel_conv_fwd.1} parent=0 // pred_check
    _
  $region19: #{_module_parallel_conv_fwd.1} parent=0 // pred_check_branch
    %361 = sbr.rel (0) target = $region21
  $region20: #{_module_parallel_conv_fwd.1} parent=0 // pred_region
    _
  $region21: #{_module_parallel_conv_fwd.1} parent=0 // pred_fallthru
    _

</llo_original>
